<compile_context>
chip_gen: v6e
topology: v6e:2x2x1
jax: 0.10.0
libtpu: 0.0.40
codegen_flags: <defaults>
</compile_context>

<pallas_src>
import jax
import jax.numpy as jnp
from jax.experimental import pallas as pl
from jax.experimental.pallas import tpu as pltpu


# ---------------------------------------------------------------------------
# Pallas copy kernel (used by the optional `materialize=True` path).
# ---------------------------------------------------------------------------

def _copy_kernel(x_ref, o_ref):
    # Pure pass-through body: output tile == input tile (HBM-bound copy).
    o_ref[...] = x_ref[...]


def _chip_tuning():
    """(per-block byte cap, vmem_limit_bytes) for the copy pipeline, by chip."""
    kind = ""
    try:
        kind = jax.devices()[0].device_kind.lower()
    except Exception:
        pass
    if "v7" in kind:
        # v7x: ~3.2 TB/s HBM per TC, so small blocks are dominated by the
        # ~0.35 us/grid-step overhead. 8 MiB blocks -> 2 bufs x (in+out) x 8 MiB
        # = 32 MiB pipelined footprint, which needs the scoped-VMEM limit raised
        # (48 MiB) but fits comfortably in the 64 MiB physical VMEM.
        return 8 * 1024 * 1024, 48 * 1024 * 1024
    if "v6" in kind:
        # v6e: 4 MiB blocks (16 MiB pipelined) sit at ~86% of HBM roofline and
        # fit the 32 MiB scoped-VMEM default without overrides.
        return 4 * 1024 * 1024, None
    # v5e (16 MiB scoped-VMEM default) and unknown chips: conservative 2 MiB
    # blocks (8 MiB pipelined), already near the ~820 GB/s roofline.
    return 2 * 1024 * 1024, None


def _pick_2d_shape(total):
    """Lane-dense 2D view (rows, cols) of a flat buffer with `total` elements.

    cols is a multiple of 128 (<= 1024) dividing `total`, preferring a row
    count that is a multiple of 8 (full sublane occupancy). `total` must be a
    multiple of 128 (guaranteed by the caller via padding).
    """
    best = None
    for k in range(8, 0, -1):          # cols in {1024, 896, ..., 128}
        cols = 128 * k
        if total % cols:
            continue
        rows = total // cols
        if best is None:
            best = (rows, cols)
        if rows % 8 == 0:
            return rows, cols
    return best


def _tiled_copy_2d(x2, block_cap_bytes, vmem_limit_bytes):
    """Row-tiled, lane-dense copy of a 2D array through VMEM."""
    rows, cols = x2.shape
    itemsize = jnp.dtype(x2.dtype).itemsize
    # Block rows sized purely from the per-chip byte budget (no artificial row
    # cap). max_rows is a multiple of 8, so any block smaller than the full
    # array satisfies the (8, 128) constraint; otherwise block == full array.
    max_rows = max(8, (block_cap_bytes // max(1, cols * itemsize)) // 8 * 8)
    block_rows = min(rows, max_rows)
    grid = (pl.cdiv(rows, block_rows),)
    # TODO(synk): profile on v7x to confirm ("parallel",) actually shards this
    #             1-D grid across both TensorCores; if only one TC issues DMAs,
    #             switch to pltpu.CORE_PARALLEL / an explicit core split.
    return pl.pallas_call(
        _copy_kernel,
        out_shape=jax.ShapeDtypeStruct((rows, cols), x2.dtype),
        grid=grid,
        in_specs=[pl.BlockSpec((block_rows, cols), lambda i: (i, 0))],
        out_specs=pl.BlockSpec((block_rows, cols), lambda i: (i, 0)),
        compiler_params=pltpu.CompilerParams(
            dimension_semantics=("parallel",),
            vmem_limit_bytes=vmem_limit_bytes,
        ),
    )(x2)


def _pallas_identity_copy(x, *, min_pallas_bytes=256 * 1024):
    """Materialize a copy of `x` through a lane-dense Pallas TPU copy kernel.

    For tensors below `min_pallas_bytes` the launch + pipeline warm-up dwarfs
    the transfer itself, so the (functionally identical) input is returned
    directly. Pass min_pallas_bytes=0 to force the kernel.
    """
    if x.size == 0:
        return x                        # Mosaic rejects zero-sized blocks.
    if x.nbytes < min_pallas_bytes:
        # TODO(synk): a direct HBM->HBM async copy (memory_space=pl.ANY) would
        #             also skip the VMEM round trip for large arrays.
        return x

    block_cap, vmem_limit = _chip_tuning()
    orig_shape, orig_dtype = x.shape, x.dtype
    itemsize = jnp.dtype(orig_dtype).itemsize
    flat = x.reshape(-1)

    # Dtype-agnostic 32-bit view: sub-32-bit dtypes pack along sublanes, so a
    # raw bf16/int8 copy can hit partially packed tiles / masked stores.
    # Bitcasting to uint32 guarantees full-vreg unmasked vld/vst and turns the
    # divisible-by-128 requirement into 4-byte units.
    bitcast_ratio = None
    if itemsize < 4 and x.nbytes % (4 * 128) == 0:
        bitcast_ratio = 4 // itemsize
        flat = jax.lax.bitcast_convert_type(
            flat.reshape(-1, bitcast_ratio), jnp.uint32)

    # Gridded fallback for totals not divisible by 128: pad up to a lane
    # multiple, copy through the same bounded-VMEM pipeline, slice back. This
    # keeps VMEM usage bounded for arbitrarily large, oddly-sized arrays.
    total = flat.shape[0]
    pad = (-total) % 128
    if pad:
        flat = jnp.pad(flat, (0, pad))

    rows, cols = _pick_2d_shape(flat.shape[0])
    out2 = _tiled_copy_2d(flat.reshape(rows, cols), block_cap, vmem_limit)

    out_flat = out2.reshape(-1)
    if pad:
        out_flat = out_flat[:total]
    if bitcast_ratio is not None:
        out_flat = jax.lax.bitcast_convert_type(out_flat, orig_dtype).reshape(-1)
    return out_flat.reshape(orig_shape)


# ---------------------------------------------------------------------------
# LazyModule: lazy-initialization mechanics mirroring the PyTorch reference.
# ---------------------------------------------------------------------------

class LazyModule:
    """JAX/Pallas port of LazyModule's lazy-initialization mechanics.

    The reference `_forward` is @abc.abstractmethod, so the base class' only
    well-defined data path hands the input through unchanged. By default that
    identity is returned with zero kernel launches; `materialize=True` routes
    it through the lane-dense Pallas copy kernel a concrete subclass would
    build its own compute on.
    """

    def __init__(self, *args, **kwargs):
        self._init_args = args
        self._init_kwargs = kwargs
        self._initialized = False
        self._fns = []
        self.signature = None
        self._input_size = None
        self._materialize = False
        self._min_pallas_bytes = 256 * 1024

    # ---- lazy-init machinery (mirrors the PyTorch reference) ----
    def __call__(self, input, *args, **kwargs):
        return self.forward(input, *args, **kwargs)

    def forward(self, input, *args, **kwargs):
        if not self._initialized:
            try:
                self._init(
                    *self._init_args,
                    input_size=self._get_input_size(input, *args, **kwargs),
                    **self._init_kwargs,
                )
            except TypeError:
                self._init(*self._init_args, **self._init_kwargs)
            for fn in self._fns:
                fn(self)              # deferred _apply functions
            if self.signature is not None:
                self._verify_signature(input, *args)
            # TODO(synk): the reference also registers NaN-check fwd/bwd hooks
            #             when mcan._check_nan is set; no JAX hook equivalent.
            self._initialized = True
        return self._forward(input, *args, **kwargs)

    def expect_signature(self, signature):
        self.signature = signature

    def _verify_signature(self, *args):
        return True

    def _get_input_size(self, *args, **kwargs):
        if len(args) > 1:
            return [self._get_input_size(a) for a in args]
        elif isinstance(args[0], (jnp.ndarray, jax.Array)):
            return args[0].shape[-1]
        else:
            return None

    def _apply(self, fn):
        if not self._initialized:
            self._fns.append(fn)
        else:
            fn(self)

    def _init(self, *args, input_size=None, materialize=False,
              min_pallas_bytes=256 * 1024, **kwargs):
        # Default _init: the base class defines no parameters.
        self._input_size = input_size
        self._materialize = bool(materialize)
        self._min_pallas_bytes = int(min_pallas_bytes)

    # ---- the hot path ----
    def _forward(self, input, *args, **kwargs):
        # TODO(synk): `_forward` is abstract in the reference module; concrete
        #             subclasses replace this with real compute/kernels.
        if self._materialize:
            return _pallas_identity_copy(
                input, min_pallas_bytes=self._min_pallas_bytes)
        # Optimized default: identity needs no kernel launch at all.
        return input


if __name__ == "__main__":
    key = jax.random.PRNGKey(0)
    # Small NCHW input consistent with the module's lazy forward.
    x = jax.random.normal(key, (2, 4, 16, 16), dtype=jnp.float32)

    # 1) Default (optimized) path: identity with zero kernel launches.
    fast = LazyModule()
    out_fast = jax.block_until_ready(fast(x))
    assert out_fast.shape == x.shape and out_fast.dtype == x.dtype
    assert bool(jnp.array_equal(out_fast, x))
    assert fast._initialized and fast._input_size == 16

    # 2) Materializing path, forced through the Pallas copy kernel
    #    (f32 flattened to (8, 256): one lane-dense block, 1-D parallel grid).
    mat = LazyModule(materialize=True, min_pallas_bytes=0)
    out = jax.block_until_ready(mat(x))
    assert out.shape == x.shape and out.dtype == x.dtype
    assert bool(jnp.array_equal(out, x))
    assert mat._initialized and mat._input_size == 16

    # 3) Sub-32-bit dtype exercises the uint32-bitcast lane-dense path
    #    (bf16 -> uint32, flattened to (8, 128)).
    xb = x.astype(jnp.bfloat16)
    mat_b = LazyModule(materialize=True, min_pallas_bytes=0)
    out_b = jax.block_until_ready(mat_b(xb))
    assert out_b.shape == xb.shape and out_b.dtype == xb.dtype
    assert bool(jnp.array_equal(out_b, xb))

    print("KERNEL_OK")
</pallas_src>

<mosaic_0001>
module attributes {stable_mosaic.version = 11 : i64} {
  func.func @_copy_kernel(%arg0: i32, %arg1: memref<8x256xf32, #tpu.memory_space<vmem>>, %arg2: memref<8x256xf32, #tpu.memory_space<vmem>>) attributes {dimension_semantics = [#tpu.dimension_semantics<parallel>], iteration_bounds = array<i64: 1>, scalar_prefetch = 0 : i64, scratch_operands = 0 : i64, tpu.core_type = #tpu.core_type<tc>, window_params = [{transform_indices = @transform_0, window_bounds = array<i64: 8, 256>}, {transform_indices = @transform_1, window_bounds = array<i64: 8, 256>}]} {
    %c0 = arith.constant 0 : index
    %c0_0 = arith.constant 0 : index
    %0 = vector.load %arg1[%c0, %c0_0] : memref<8x256xf32, #tpu.memory_space<vmem>>, vector<8x256xf32>
    %c0_1 = arith.constant 0 : index
    %c0_2 = arith.constant 0 : index
    %1 = vector.load %arg2[%c0_1, %c0_2] : memref<8x256xf32, #tpu.memory_space<vmem>>, vector<8x256xf32>
    tpu.vector_store %arg2[%c0_1, %c0_2], %0 {strides = array<i32>} : memref<8x256xf32, #tpu.memory_space<vmem>>, vector<8x256xf32>,
    return
  }
  func.func @transform_0(%arg0: i32) -> (i32, i32) {
    %c0_i32 = arith.constant 0 : i32
    %c0_i32_0 = arith.constant 0 : i32
    return %arg0, %c0_i32 : i32, i32
  }
  func.func @transform_1(%arg0: i32) -> (i32, i32) {
    %c0_i32 = arith.constant 0 : i32
    %c0_i32_0 = arith.constant 0 : i32
    return %arg0, %c0_i32 : i32, i32
  }
}

</mosaic_0001>

<llo_original>
// kernel: tpu_custom_call.1
$region0: #{tpu_custom_call.1}
  #allocation0 [shape = 'u32[]', space=smem, size = 0x4, offset = 0x4, fixed_abs, tag = 'smem constant byte address 0x4 - core index']
  #allocation1 [shape = 'u32[144,128]{1,0:T(1,128)}', space=vmem, size = 0x12000, scoped, tag = 'internal scratch']
  %s0 = inlined_call_operand.hbm [shape: f32[8,256], index: 0, kind: input, shape index: {}]
  %s1 = inlined_call_operand.hbm [shape: f32[8,256], index: 1, kind: output, shape index: {}]
  %s2 = sld [smem:[#allocation0]]
  $region18: #{tpu_custom_call.1} parent=0
    _
  %s4 = ssub.s32 1, %s2
  %s5 = scalar_select 0, %s4, %s2
  $region1: #{tpu_custom_call.1} parent=0
    #allocation2 [shape = 'u8[8192]{0}', space=vmem, size = 0x2000, scoped, tag = 'input window, operand 0, single buffered']
    #allocation3 [shape = 's32[1]{0}', space=sflag, size = 0x4, scoped, tag = 'scoped memory for tpu_custom_call.1']
    #allocation4 [shape = 's32[1]{0}', space=sflag, size = 0x4, scoped, tag = 'scoped memory for tpu_custom_call.1']
    #allocation5 [shape = 'u8[8192]{0}', space=vmem, size = 0x2000, scoped, tag = 'output window, operand 0, single buffered']
    %6 = vsyncpa [#allocation3], 0
    %7 = vsyncpa [#allocation4], 0
    // Predicated region
    $region2: #{tpu_custom_call.1} parent=1 // pred_check
      _
    $region3: #{tpu_custom_call.1} parent=1 // pred_check_branch
      %9 = sbr.rel (0) target = $region5
    $region4: #{tpu_custom_call.1} parent=1 // pred_region
      %s11 = ssub.s32 256, 256
      %12 = vsyncadd [#allocation3], %s11
      %s14 = sshll.u32 [#allocation2], 4
      %s15 = int_to_ptr.vmem [resolvable:$true] %s14
      %17 = dma.hbm_to_vmem [thread:$0]  %s0, 256, %s15, [#allocation3]
    $region5: #{tpu_custom_call.1} parent=1 // pred_fallthru
      _
    // Predicated region
    $region6: #{tpu_custom_call.1} parent=1 // pred_check
      _
    $region7: #{tpu_custom_call.1} parent=1 // pred_check_branch
      %19 = sbr.rel (0) target = $region9
    $region8: #{tpu_custom_call.1} parent=1 // pred_region
      %20 = dma.done [#allocation3], 256
    $region9: #{tpu_custom_call.1} parent=1 // pred_fallthru
      _
    %v21 = vld [vmem:[#allocation2] sm:$0xff]
    %v22 = vld [vmem:[#allocation2 + $0x8] sm:$0xff]
    %23 = vst [vmem:[#allocation5] sm:$0xff] %v21
    %24 = vst [vmem:[#allocation5 + $0x8] sm:$0xff] %v22
    // Predicated region
    $region10: #{tpu_custom_call.1} parent=1 // pred_check
      _
    $region11: #{tpu_custom_call.1} parent=1 // pred_check_branch
      %26 = sbr.rel (0) target = $region13
    $region12: #{tpu_custom_call.1} parent=1 // pred_region
      %s28 = ssub.s32 256, 256
      %29 = vsyncadd [#allocation4], %s28
      %s31 = sshll.u32 [#allocation5], 4
      %s32 = int_to_ptr.vmem [resolvable:$true] %s31
      %34 = dma.vmem_to_hbm [thread:$0]  %s32, 256, %s1, [#allocation4]
    $region13: #{tpu_custom_call.1} parent=1 // pred_fallthru
      _
    // Predicated region
    $region14: #{tpu_custom_call.1} parent=1 // pred_check
      _
    $region15: #{tpu_custom_call.1} parent=1 // pred_check_branch
      %36 = sbr.rel (0) target = $region17
    $region16: #{tpu_custom_call.1} parent=1 // pred_region
      %37 = dma.done [#allocation4], 256
    $region17: #{tpu_custom_call.1} parent=1 // pred_fallthru
      _
    %38 = vsyncpa [#allocation3], 1
    %39 = vsyncpa [#allocation4], 1

</llo_original>
